<compile_context>
chip_gen: v7x
topology: tpu7x:2x2x1
jax: 0.10.0
libtpu: 0.0.40
codegen_flags: <defaults>
</compile_context>

<pallas_src>
import jax
import jax.numpy as jnp
from jax.experimental import pallas as pl
from jax.experimental.pallas import tpu as pltpu

# ---- problem sizes (from the PyTorch module) --------------------------------
IN_DIM = 57
OUT_DIM = 60
FIRST_LAYER = 128
SECOND_LAYER = 64
THIRD_LAYER = 60
# The double fc4 application is only shape-consistent if third_layer == 60.
assert THIRD_LAYER == OUT_DIM, "forward applies fc4 twice; needs third_layer == 60"

# ---- lane-friendly padded sizes ----------------------------------------------
IN_PAD = 64     # 57 -> 64 (zero-padded obs columns / fc1 rows)
HID3_PAD = 64   # 60 -> 64 (fc3 out / fc4 in, zero-padded)
OUT_PAD = 64    # 60 -> 64 (fc4 out; padded logit lanes masked with -1e30)
NEG_INF = -1e30

DEFAULT_TILE_B = 1024


def _round_up(x, m):
    return (x + m - 1) // m * m


def card_agent_kernel(x_ref, w1_ref, b1_ref, w2_ref, b2_ref,
                      w3_ref, b3_ref, w4_ref, b4_ref, o_ref):
    cdt = w1_ref.dtype  # matmul operand dtype (f32 or bf16); accumulate in f32

    x = x_ref[...]

    # fc1 + relu
    h = jnp.dot(x, w1_ref[...], preferred_element_type=jnp.float32) + b1_ref[...]
    h = jnp.maximum(h, 0.0)

    # fc2 + relu
    h = jnp.dot(h.astype(cdt), w2_ref[...],
                preferred_element_type=jnp.float32) + b2_ref[...]
    h = jnp.maximum(h, 0.0)

    # fc3 + relu
    h = jnp.dot(h.astype(cdt), w3_ref[...],
                preferred_element_type=jnp.float32) + b3_ref[...]
    h = jnp.maximum(h, 0.0)

    # fc4 applied twice; read weight/bias once.  Padded bias lanes are -1e30:
    # relu clamps them to 0 after the first pass, softmax masks them after the
    # second.
    w4 = w4_ref[...]
    b4 = b4_ref[...]
    h = jnp.dot(h.astype(cdt), w4, preferred_element_type=jnp.float32) + b4
    h = jnp.maximum(h, 0.0)
    logits = jnp.dot(h.astype(cdt), w4, preferred_element_type=jnp.float32) + b4

    # Softmax over lanes in f32; padded lanes contribute exp(-huge) == 0.
    # Exact reciprocal (one divide per row) so rows sum to 1 exactly.
    m = jnp.max(logits, axis=-1, keepdims=True)
    e = jnp.exp(logits - m)
    denom = jnp.sum(e, axis=-1, keepdims=True)
    o_ref[...] = (e * (1.0 / denom)).astype(o_ref.dtype)


def pad_params(params, compute_dtype=jnp.float32):
    """Zero-pad parameters to lane-friendly shapes.

    Weights are stored (in_features, out_features) and cast to compute_dtype
    (bf16 for MXU throughput if desired); biases stay f32 so all elementwise /
    softmax math remains f32.  In production, pad/cast once at init rather
    than per call.
    """
    (w1, b1), (w2, b2), (w3, b3), (w4, b4) = params

    def pad2(a, rows, cols, fill=0.0):
        out = jnp.full((rows, cols), fill, jnp.float32)
        return out.at[:a.shape[0], :a.shape[1]].set(a.astype(jnp.float32))

    w1p = pad2(w1, IN_PAD, FIRST_LAYER)
    w2p = w2.astype(jnp.float32)
    w3p = pad2(w3, SECOND_LAYER, HID3_PAD)
    w4p = pad2(w4, HID3_PAD, OUT_PAD)

    b1p = b1.astype(jnp.float32)
    b2p = b2.astype(jnp.float32)
    b3p = pad2(b3, 1, HID3_PAD)
    b4p = pad2(b4, 1, OUT_PAD, fill=NEG_INF)   # mask padded logit lanes

    cdt = compute_dtype
    return (w1p.astype(cdt), b1p, w2p.astype(cdt), b2p,
            w3p.astype(cdt), b3p, w4p.astype(cdt), b4p)


def card_agent_forward(obs, params, *, compute_dtype=jnp.float32,
                       tile_b=DEFAULT_TILE_B):
    w1, b1, w2, b2, w3, b3, w4, b4 = pad_params(params, compute_dtype)

    B = obs.shape[0]
    # Batch padded to a multiple of 16 (safe for both f32 and bf16 sublane
    # packing), then tiled; tile never exceeds the padded batch.
    b_pad = _round_up(max(B, 16), 16)
    tile_b = min(tile_b, b_pad)
    b_pad = _round_up(b_pad, tile_b)

    obs_p = jnp.zeros((b_pad, IN_PAD), compute_dtype)
    obs_p = obs_p.at[:B, :IN_DIM].set(obs.astype(compute_dtype))

    itemsize = jnp.dtype(compute_dtype).itemsize
    weight_bytes = sum(int(a.size) * a.dtype.itemsize
                       for a in (w1, b1, w2, b2, w3, b3, w4, b4))
    flops = 2 * b_pad * (IN_PAD * FIRST_LAYER + FIRST_LAYER * SECOND_LAYER
                         + SECOND_LAYER * HID3_PAD + 2 * HID3_PAD * OUT_PAD)
    cost = pl.CostEstimate(
        flops=flops,
        transcendentals=b_pad * OUT_PAD,
        bytes_accessed=b_pad * IN_PAD * itemsize + b_pad * OUT_PAD * 4
                       + weight_bytes,
    )

    out = pl.pallas_call(
        card_agent_kernel,
        out_shape=jax.ShapeDtypeStruct((b_pad, OUT_PAD), jnp.float32),
        grid=(b_pad // tile_b,),
        in_specs=[
            pl.BlockSpec((tile_b, IN_PAD), lambda i: (i, 0)),   # obs: tiled
            pl.BlockSpec(w1.shape, lambda i: (0, 0)),           # weights/biases:
            pl.BlockSpec(b1.shape, lambda i: (0, 0)),           # VMEM-resident
            pl.BlockSpec(w2.shape, lambda i: (0, 0)),
            pl.BlockSpec(b2.shape, lambda i: (0, 0)),
            pl.BlockSpec(w3.shape, lambda i: (0, 0)),
            pl.BlockSpec(b3.shape, lambda i: (0, 0)),
            pl.BlockSpec(w4.shape, lambda i: (0, 0)),
            pl.BlockSpec(b4.shape, lambda i: (0, 0)),
        ],
        out_specs=pl.BlockSpec((tile_b, OUT_PAD), lambda i: (i, 0)),
        compiler_params=pltpu.CompilerParams(
            dimension_semantics=("parallel",)),
        cost_estimate=cost,
    )(obs_p, w1, b1, w2, b2, w3, b3, w4, b4)

    # Strip batch + lane padding back to the module's (B, 60) output.
    return out[:B, :OUT_DIM]


def init_linear(key, fan_in, fan_out):
    # PyTorch nn.Linear default init: U(-1/sqrt(fan_in), 1/sqrt(fan_in));
    # stored transposed (in, out) so the kernel computes x @ W + b.
    kw, kb = jax.random.split(key)
    bound = 1.0 / jnp.sqrt(jnp.float32(fan_in))
    w = jax.random.uniform(kw, (fan_in, fan_out), jnp.float32, -bound, bound)
    b = jax.random.uniform(kb, (1, fan_out), jnp.float32, -bound, bound)
    return w, b


def card_agent_reference(obs, params):
    (w1, b1), (w2, b2), (w3, b3), (w4, b4) = params

    def lin(x, w, b):
        return jnp.dot(x, w, preferred_element_type=jnp.float32) + b

    h = jax.nn.relu(lin(obs, w1, b1))
    h = jax.nn.relu(lin(h, w2, b2))
    h = jax.nn.relu(lin(h, w3, b3))
    h = jax.nn.relu(lin(h, w4, b4))
    return jax.nn.softmax(lin(h, w4, b4), axis=-1)


if __name__ == "__main__":
    key = jax.random.PRNGKey(0)
    k_obs, k1, k2, k3, k4 = jax.random.split(key, 5)

    B = 8
    obs = jax.random.normal(k_obs, (B, IN_DIM), jnp.float32)
    params = (
        init_linear(k1, IN_DIM, FIRST_LAYER),
        init_linear(k2, FIRST_LAYER, SECOND_LAYER),
        init_linear(k3, SECOND_LAYER, THIRD_LAYER),
        init_linear(k4, THIRD_LAYER, OUT_DIM),
    )

    # f32 path: must match the pure-JAX reference closely and sum to 1.
    out = jax.block_until_ready(card_agent_forward(obs, params))
    ref = card_agent_reference(obs, params)
    assert out.shape == (B, OUT_DIM)
    assert jnp.allclose(out, ref, atol=1e-4, rtol=1e-4), \
        float(jnp.max(jnp.abs(out - ref)))
    assert jnp.allclose(jnp.sum(out, axis=-1), 1.0, atol=1e-3)

    # bf16-matmul path (f32 accumulate + f32 softmax): smoke test only —
    # probabilities stay valid and normalized.
    out_bf16 = jax.block_until_ready(
        card_agent_forward(obs, params, compute_dtype=jnp.bfloat16))
    assert out_bf16.shape == (B, OUT_DIM)
    assert jnp.allclose(jnp.sum(out_bf16, axis=-1), 1.0, atol=1e-3)
    assert bool(jnp.all(out_bf16 >= 0.0))

    print("KERNEL_OK")
</pallas_src>

<mosaic_0001>
module attributes {stable_mosaic.version = 11 : i64} {
  func.func @card_agent_kernel(%arg0: i32, %arg1: memref<16x64xf32, #tpu.memory_space<vmem>>, %arg2: memref<64x128xf32, #tpu.memory_space<vmem>>, %arg3: memref<1x128xf32, #tpu.memory_space<vmem>>, %arg4: memref<128x64xf32, #tpu.memory_space<vmem>>, %arg5: memref<1x64xf32, #tpu.memory_space<vmem>>, %arg6: memref<64x64xf32, #tpu.memory_space<vmem>>, %arg7: memref<1x64xf32, #tpu.memory_space<vmem>>, %arg8: memref<64x64xf32, #tpu.memory_space<vmem>>, %arg9: memref<1x64xf32, #tpu.memory_space<vmem>>, %arg10: memref<16x64xf32, #tpu.memory_space<vmem>>) attributes {dimension_semantics = [#tpu.dimension_semantics<parallel>], iteration_bounds = array<i64: 1>, scalar_prefetch = 0 : i64, scratch_operands = 0 : i64, tpu.core_type = #tpu.core_type<tc>, window_params = [{transform_indices = @transform_0, window_bounds = array<i64: 16, 64>}, {pipeline_mode = #tpu.pipeline_mode<synchronous>, transform_indices = @transform_1, window_bounds = array<i64: 64, 128>}, {pipeline_mode = #tpu.pipeline_mode<synchronous>, transform_indices = @transform_2, window_bounds = array<i64: 1, 128>}, {pipeline_mode = #tpu.pipeline_mode<synchronous>, transform_indices = @transform_3, window_bounds = array<i64: 128, 64>}, {pipeline_mode = #tpu.pipeline_mode<synchronous>, transform_indices = @transform_4, window_bounds = array<i64: 1, 64>}, {pipeline_mode = #tpu.pipeline_mode<synchronous>, transform_indices = @transform_5, window_bounds = array<i64: 64, 64>}, {pipeline_mode = #tpu.pipeline_mode<synchronous>, transform_indices = @transform_6, window_bounds = array<i64: 1, 64>}, {pipeline_mode = #tpu.pipeline_mode<synchronous>, transform_indices = @transform_7, window_bounds = array<i64: 64, 64>}, {pipeline_mode = #tpu.pipeline_mode<synchronous>, transform_indices = @transform_8, window_bounds = array<i64: 1, 64>}, {transform_indices = @transform_9, window_bounds = array<i64: 16, 64>}]} {
    %c0 = arith.constant 0 : index
    %c0_0 = arith.constant 0 : index
    %0 = vector.load %arg1[%c0, %c0_0] : memref<16x64xf32, #tpu.memory_space<vmem>>, vector<16x64xf32>
    %c0_1 = arith.constant 0 : index
    %c0_2 = arith.constant 0 : index
    %1 = vector.load %arg2[%c0_1, %c0_2] : memref<64x128xf32, #tpu.memory_space<vmem>>, vector<64x128xf32>
    %cst = arith.constant dense<0.000000e+00> : vector<16x128xf32>
    %2 = tpu.matmul %0, %1, %cst {dimension_numbers = #tpu.dot_dimension_numbers<[1], [0], [0], [1], [0, 0, 1, 1], [], []>} : vector<16x64xf32>, vector<64x128xf32>, vector<16x128xf32> -> vector<16x128xf32>
    %c0_3 = arith.constant 0 : index
    %c0_4 = arith.constant 0 : index
    %3 = vector.load %arg3[%c0_3, %c0_4] : memref<1x128xf32, #tpu.memory_space<vmem>>, vector<1x128xf32>
    %4 = vector.broadcast %3 : vector<1x128xf32> to vector<16x128xf32>
    %5 = arith.addf %2, %4 : vector<16x128xf32>
    %cst_5 = arith.constant 0.000000e+00 : f32
    %6 = vector.broadcast %cst_5 : f32 to vector<16x128xf32>
    %7 = arith.maximumf %5, %6 : vector<16x128xf32>
    %c0_6 = arith.constant 0 : index
    %c0_7 = arith.constant 0 : index
    %8 = vector.load %arg4[%c0_6, %c0_7] : memref<128x64xf32, #tpu.memory_space<vmem>>, vector<128x64xf32>
    %cst_8 = arith.constant dense<0.000000e+00> : vector<16x64xf32>
    %9 = tpu.matmul %7, %8, %cst_8 {dimension_numbers = #tpu.dot_dimension_numbers<[1], [0], [0], [1], [0, 0, 1, 1], [], []>} : vector<16x128xf32>, vector<128x64xf32>, vector<16x64xf32> -> vector<16x64xf32>
    %c0_9 = arith.constant 0 : index
    %c0_10 = arith.constant 0 : index
    %10 = vector.load %arg5[%c0_9, %c0_10] : memref<1x64xf32, #tpu.memory_space<vmem>>, vector<1x64xf32>
    %11 = vector.broadcast %10 : vector<1x64xf32> to vector<16x64xf32>
    %12 = arith.addf %9, %11 : vector<16x64xf32>
    %cst_11 = arith.constant 0.000000e+00 : f32
    %13 = vector.broadcast %cst_11 : f32 to vector<16x64xf32>
    %14 = arith.maximumf %12, %13 : vector<16x64xf32>
    %c0_12 = arith.constant 0 : index
    %c0_13 = arith.constant 0 : index
    %15 = vector.load %arg6[%c0_12, %c0_13] : memref<64x64xf32, #tpu.memory_space<vmem>>, vector<64x64xf32>
    %cst_14 = arith.constant dense<0.000000e+00> : vector<16x64xf32>
    %16 = tpu.matmul %14, %15, %cst_14 {dimension_numbers = #tpu.dot_dimension_numbers<[1], [0], [0], [1], [0, 0, 1, 1], [], []>} : vector<16x64xf32>, vector<64x64xf32>, vector<16x64xf32> -> vector<16x64xf32>
    %c0_15 = arith.constant 0 : index
    %c0_16 = arith.constant 0 : index
    %17 = vector.load %arg7[%c0_15, %c0_16] : memref<1x64xf32, #tpu.memory_space<vmem>>, vector<1x64xf32>
    %18 = vector.broadcast %17 : vector<1x64xf32> to vector<16x64xf32>
    %19 = arith.addf %16, %18 : vector<16x64xf32>
    %cst_17 = arith.constant 0.000000e+00 : f32
    %20 = vector.broadcast %cst_17 : f32 to vector<16x64xf32>
    %21 = arith.maximumf %19, %20 : vector<16x64xf32>
    %c0_18 = arith.constant 0 : index
    %c0_19 = arith.constant 0 : index
    %22 = vector.load %arg8[%c0_18, %c0_19] : memref<64x64xf32, #tpu.memory_space<vmem>>, vector<64x64xf32>
    %c0_20 = arith.constant 0 : index
    %c0_21 = arith.constant 0 : index
    %23 = vector.load %arg9[%c0_20, %c0_21] : memref<1x64xf32, #tpu.memory_space<vmem>>, vector<1x64xf32>
    %cst_22 = arith.constant dense<0.000000e+00> : vector<16x64xf32>
    %24 = tpu.matmul %21, %22, %cst_22 {dimension_numbers = #tpu.dot_dimension_numbers<[1], [0], [0], [1], [0, 0, 1, 1], [], []>} : vector<16x64xf32>, vector<64x64xf32>, vector<16x64xf32> -> vector<16x64xf32>
    %25 = vector.broadcast %23 : vector<1x64xf32> to vector<16x64xf32>
    %26 = arith.addf %24, %25 : vector<16x64xf32>
    %cst_23 = arith.constant 0.000000e+00 : f32
    %27 = vector.broadcast %cst_23 : f32 to vector<16x64xf32>
    %28 = arith.maximumf %26, %27 : vector<16x64xf32>
    %cst_24 = arith.constant dense<0.000000e+00> : vector<16x64xf32>
    %29 = tpu.matmul %28, %22, %cst_24 {dimension_numbers = #tpu.dot_dimension_numbers<[1], [0], [0], [1], [0, 0, 1, 1], [], []>} : vector<16x64xf32>, vector<64x64xf32>, vector<16x64xf32> -> vector<16x64xf32>
    %30 = vector.broadcast %23 : vector<1x64xf32> to vector<16x64xf32>
    %31 = arith.addf %29, %30 : vector<16x64xf32>
    %cst_25 = arith.constant dense<0xFF800000> : vector<16xf32>
    %32 = vector.multi_reduction <maximumf>, %31, %cst_25 [1] : vector<16x64xf32> to vector<16xf32>
    %33 = vector.shape_cast %32 : vector<16xf32> to vector<16x1xf32>
    %34 = vector.broadcast %33 : vector<16x1xf32> to vector<16x64xf32>
    %35 = arith.subf %31, %34 : vector<16x64xf32>
    %36 = math.exp %35 : vector<16x64xf32>
    %cst_26 = arith.constant dense<0.000000e+00> : vector<16xf32>
    %37 = vector.multi_reduction <add>, %36, %cst_26 [1] : vector<16x64xf32> to vector<16xf32>
    %38 = vector.shape_cast %37 : vector<16xf32> to vector<16x1xf32>
    %cst_27 = arith.constant 1.000000e+00 : f32
    %39 = vector.broadcast %cst_27 : f32 to vector<16x1xf32>
    %40 = arith.divf %39, %38 : vector<16x1xf32>
    %41 = vector.broadcast %40 : vector<16x1xf32> to vector<16x64xf32>
    %42 = arith.mulf %36, %41 : vector<16x64xf32>
    %c0_28 = arith.constant 0 : index
    %c0_29 = arith.constant 0 : index
    %43 = vector.load %arg10[%c0_28, %c0_29] : memref<16x64xf32, #tpu.memory_space<vmem>>, vector<16x64xf32>
    tpu.vector_store %arg10[%c0_28, %c0_29], %42 {strides = array<i32>} : memref<16x64xf32, #tpu.memory_space<vmem>>, vector<16x64xf32>,
    return
  }
  func.func @transform_0(%arg0: i32) -> (i32, i32) {
    %c0_i32 = arith.constant 0 : i32
    %c0_i32_0 = arith.constant 0 : i32
    return %arg0, %c0_i32 : i32, i32
  }
  func.func @transform_1(%arg0: i32) -> (i32, i32) {
    %c0_i32 = arith.constant 0 : i32
    %c0_i32_0 = arith.constant 0 : i32
    %c0_i32_1 = arith.constant 0 : i32
    return %c0_i32, %c0_i32_0 : i32, i32
  }
  func.func @transform_2(%arg0: i32) -> (i32, i32) {
    %c0_i32 = arith.constant 0 : i32
    %c0_i32_0 = arith.constant 0 : i32
    %c0_i32_1 = arith.constant 0 : i32
    return %c0_i32, %c0_i32_0 : i32, i32
  }
  func.func @transform_3(%arg0: i32) -> (i32, i32) {
    %c0_i32 = arith.constant 0 : i32
    %c0_i32_0 = arith.constant 0 : i32
    %c0_i32_1 = arith.constant 0 : i32
    return %c0_i32, %c0_i32_0 : i32, i32
  }
  func.func @transform_4(%arg0: i32) -> (i32, i32) {
    %c0_i32 = arith.constant 0 : i32
    %c0_i32_0 = arith.constant 0 : i32
    %c0_i32_1 = arith.constant 0 : i32
    return %c0_i32, %c0_i32_0 : i32, i32
  }
  func.func @transform_5(%arg0: i32) -> (i32, i32) {
    %c0_i32 = arith.constant 0 : i32
    %c0_i32_0 = arith.constant 0 : i32
    %c0_i32_1 = arith.constant 0 : i32
    return %c0_i32, %c0_i32_0 : i32, i32
  }
  func.func @transform_6(%arg0: i32) -> (i32, i32) {
    %c0_i32 = arith.constant 0 : i32
    %c0_i32_0 = arith.constant 0 : i32
    %c0_i32_1 = arith.constant 0 : i32
    return %c0_i32, %c0_i32_0 : i32, i32
  }
  func.func @transform_7(%arg0: i32) -> (i32, i32) {
    %c0_i32 = arith.constant 0 : i32
    %c0_i32_0 = arith.constant 0 : i32
    %c0_i32_1 = arith.constant 0 : i32
    return %c0_i32, %c0_i32_0 : i32, i32
  }
  func.func @transform_8(%arg0: i32) -> (i32, i32) {
    %c0_i32 = arith.constant 0 : i32
    %c0_i32_0 = arith.constant 0 : i32
    %c0_i32_1 = arith.constant 0 : i32
    return %c0_i32, %c0_i32_0 : i32, i32
  }
  func.func @transform_9(%arg0: i32) -> (i32, i32) {
    %c0_i32 = arith.constant 0 : i32
    %c0_i32_0 = arith.constant 0 : i32
    return %arg0, %c0_i32 : i32, i32
  }
}

</mosaic_0001>

<llo_original>
// kernel: tpu_custom_call.1
$region0: #{tpu_custom_call.1}
  #allocation0 [shape = 'u32[]', space=smem, size = 0x4, offset = 0x4, fixed_abs, tag = 'smem constant byte address 0x4 - core index']
  #allocation1 [shape = 'u32[144,128]{1,0:T(1,128)}', space=vmem, size = 0x12000, scoped, tag = 'internal scratch']
  %s0 = inlined_call_operand.hbm [shape: f32[16,64], index: 0, kind: input, shape index: {}]
  %s1 = inlined_call_operand.vmem [shape: f32[64,128], index: 1, kind: input, shape index: {}]
  %s2 = inlined_call_operand.vmem [shape: f32[1,128], index: 2, kind: input, shape index: {}]
  %s3 = inlined_call_operand.vmem [shape: f32[128,64], index: 3, kind: input, shape index: {}]
  %s4 = inlined_call_operand.vmem [shape: f32[1,64], index: 4, kind: input, shape index: {}]
  %s5 = inlined_call_operand.vmem [shape: f32[64,64], index: 5, kind: input, shape index: {}]
  %s6 = inlined_call_operand.vmem [shape: f32[1,64], index: 6, kind: input, shape index: {}]
  %s7 = inlined_call_operand.vmem [shape: f32[64,64], index: 7, kind: input, shape index: {}]
  %s8 = inlined_call_operand.vmem [shape: f32[1,64], index: 8, kind: input, shape index: {}]
  %s9 = inlined_call_operand.hbm [shape: f32[16,64], index: 9, kind: output, shape index: {}]
  %s10 = sld [smem:[#allocation0]]
  $region50: #{tpu_custom_call.1} parent=0
    _
  %s12 = ssub.s32 1, %s10
  %s13 = scalar_select 0, %s12, %s10
  $region1: #{tpu_custom_call.1} parent=0
    #allocation2 [shape = 'u8[8192]{0}', space=vmem, size = 0x2000, scoped, tag = 'input window, operand 0, single buffered']
    #allocation3 [shape = 's32[1]{0}', space=sflag, size = 0x4, scoped, tag = 'scoped memory for tpu_custom_call.1']
    #allocation4 [shape = 's32[1]{0}', space=sflag, size = 0x4, scoped, tag = 'scoped memory for tpu_custom_call.1']
    #allocation5 [shape = 'u8[8192]{0}', space=vmem, size = 0x2000, scoped, tag = 'output window, operand 0, single buffered']
    %14 = vsyncpa [#allocation3], 0
    %15 = vsyncpa [#allocation4], 0
    // Predicated region
    $region2: #{tpu_custom_call.1} parent=1 // pred_check
      _
    $region3: #{tpu_custom_call.1} parent=1 // pred_check_branch
      %17 = sbr.rel (0) target = $region5
    $region4: #{tpu_custom_call.1} parent=1 // pred_region
      %s19 = ssub.s32 256, 256
      %20 = vsyncadd [#allocation3], %s19
      %s21 = sshll.u32 [#allocation2], 4
      %s22 = int_to_ptr.vmem [resolvable:$true] %s21
      %27 = dma.hbm_to_vmem [thread:$0]  %s0, 256, %s22, [#allocation3], 128, 128, 8
    $region5: #{tpu_custom_call.1} parent=1 // pred_fallthru
      _
    // Predicated region
    $region6: #{tpu_custom_call.1} parent=1 // pred_check
      _
    $region7: #{tpu_custom_call.1} parent=1 // pred_check_branch
      %29 = sbr.rel (0) target = $region9
    $region8: #{tpu_custom_call.1} parent=1 // pred_region
      _
    $region9: #{tpu_custom_call.1} parent=1 // pred_fallthru
      _
    // Predicated region
    $region10: #{tpu_custom_call.1} parent=1 // pred_check
      _
    $region11: #{tpu_custom_call.1} parent=1 // pred_check_branch
      %31 = sbr.rel (0) target = $region13
    $region12: #{tpu_custom_call.1} parent=1 // pred_region
      _
    $region13: #{tpu_custom_call.1} parent=1 // pred_fallthru
      _
    // Predicated region
    $region14: #{tpu_custom_call.1} parent=1 // pred_check
      _
    $region15: #{tpu_custom_call.1} parent=1 // pred_check_branch
      %33 = sbr.rel (0) target = $region17
    $region16: #{tpu_custom_call.1} parent=1 // pred_region
      _
    $region17: #{tpu_custom_call.1} parent=1 // pred_fallthru
      _
    // Predicated region
    $region18: #{tpu_custom_call.1} parent=1 // pred_check
      _
    $region19: #{tpu_custom_call.1} parent=1 // pred_check_branch
      %35 = sbr.rel (0) target = $region21
    $region20: #{tpu_custom_call.1} parent=1 // pred_region
      _
    $region21: #{tpu_custom_call.1} parent=1 // pred_fallthru
      _
    // Predicated region
    $region22: #{tpu_custom_call.1} parent=1 // pred_check
      _
    $region23: #{tpu_custom_call.1} parent=1 // pred_check_branch
      %37 = sbr.rel (0) target = $region25
    $region24: #{tpu_custom_call.1} parent=1 // pred_region
      _
    $region25: #{tpu_custom_call.1} parent=1 // pred_fallthru
      _
    // Predicated region
    $region26: #{tpu_custom_call.1} parent=1 // pred_check
      _
    $region27: #{tpu_custom_call.1} parent=1 // pred_check_branch
      %39 = sbr.rel (0) target = $region29
    $region28: #{tpu_custom_call.1} parent=1 // pred_region
      _
    $region29: #{tpu_custom_call.1} parent=1 // pred_fallthru
      _
    // Predicated region
    $region30: #{tpu_custom_call.1} parent=1 // pred_check
      _
    $region31: #{tpu_custom_call.1} parent=1 // pred_check_branch
      %41 = sbr.rel (0) target = $region33
    $region32: #{tpu_custom_call.1} parent=1 // pred_region
      _
    $region33: #{tpu_custom_call.1} parent=1 // pred_fallthru
      _
    // Predicated region
    $region34: #{tpu_custom_call.1} parent=1 // pred_check
      _
    $region35: #{tpu_custom_call.1} parent=1 // pred_check_branch
      %43 = sbr.rel (0) target = $region37
    $region36: #{tpu_custom_call.1} parent=1 // pred_region
      _
    $region37: #{tpu_custom_call.1} parent=1 // pred_fallthru
      _
    // Predicated region
    $region38: #{tpu_custom_call.1} parent=1 // pred_check
      _
    $region39: #{tpu_custom_call.1} parent=1 // pred_check_branch
      %45 = sbr.rel (0) target = $region41
    $region40: #{tpu_custom_call.1} parent=1 // pred_region
      %46 = dma.done [#allocation3], 256
    $region41: #{tpu_custom_call.1} parent=1 // pred_fallthru
      _
    %v47 = vld [vmem:[#allocation2] sm:$0xff]
    %v48 = vld [vmem:[#allocation2 + $0x8] sm:$0xff]
    %v49 = vld [vmem:[%s1] sm:$0xff]
    %v50 = vld [vmem:[%s1 + $0x8] sm:$0xff]
    %v51 = vld [vmem:[%s1 + $0x10] sm:$0xff]
    %v52 = vld [vmem:[%s1 + $0x18] sm:$0xff]
    %v53 = vld [vmem:[%s1 + $0x20] sm:$0xff]
    %v54 = vld [vmem:[%s1 + $0x28] sm:$0xff]
    %v55 = vld [vmem:[%s1 + $0x30] sm:$0xff]
    %v56 = vld [vmem:[%s1 + $0x38] sm:$0xff]
    %v57 = vld [vmem:[%s2] sm:$0x1]
    %v59 = vlaneseq
    %v60 = vshrl.u32 %v59, 7
    %v61 = vsub.s32 0, %v60
    %v62 = vrot.slane %v57, %v61
    %vm64 = vcmask 523264
    %v66 = vsel %vm64, %v47, 0
    %v69 = vsel %vm64, %v48, 0
    %71 = vmatprep.subr.mxu0 0.0
    %72 = vmatpush1.msra.mxu0 %v49
    %73 = vmatprep.subr.mxu0 0.0
    %74 = vmatpush1.msra.mxu0 %v50
    %75 = vmatprep.subr.mxu0 0.0
    %76 = vmatpush1.msra.mxu0 %v51
    %77 = vmatprep.subr.mxu0 0.0
    %78 = vmatpush1.msra.mxu0 %v52
    %79 = vmatprep.subr.mxu0 0.0
    %80 = vmatpush1.msra.mxu0 %v53
    %81 = vmatprep.subr.mxu0 0.0
    %82 = vmatpush1.msra.mxu0 %v54
    %83 = vmatprep.subr.mxu0 0.0
    %84 = vmatpush1.msra.mxu0 %v55
    %85 = vmatprep.subr.mxu0 0.0
    %86 = vmatpush1.msra.mxu0 %v56
    %87 = vmatprep.subr.mxu0 0.0
    %88 = vmatpush1.msra.mxu0 0.0
    %89 = vmatprep.subr.mxu0 0.0
    %90 = vmatpush1.msra.mxu0 0.0
    %91 = vmatprep.subr.mxu0 0.0
    %92 = vmatpush1.msra.mxu0 0.0
    %93 = vmatprep.subr.mxu0 0.0
    %94 = vmatpush1.msra.mxu0 0.0
    %95 = vmatprep.subr.mxu0 0.0
    %96 = vmatpush1.msra.mxu0 0.0
    %97 = vmatprep.subr.mxu0 0.0
    %98 = vmatpush1.msra.mxu0 0.0
    %99 = vmatprep.subr.mxu0 0.0
    %100 = vmatpush1.msra.mxu0 0.0
    %101 = vmatprep.subr.mxu0 0.0
    %102 = vmatpush1.msra.mxu0 0.0
    %103 = vmatprep.subr.mxu0 0.0
    %104 = vmatpush1.msra.mxu0 0.0
    %105 = vmatprep.subr.mxu0 0.0
    %106 = vmatpush1.msra.mxu0 0.0
    %107 = vmatprep.subr.mxu0 0.0
    %108 = vmatpush1.msra.mxu0 0.0
    %109 = vmatprep.subr.mxu0 0.0
    %110 = vmatpush1.msra.mxu0 0.0
    %111 = vmatprep.subr.mxu0 0.0
    %112 = vmatpush1.msra.mxu0 0.0
    %113 = vmatprep.subr.mxu0 0.0
    %114 = vmatpush1.msra.mxu0 0.0
    %115 = vmatprep.subr.mxu0 0.0
    %116 = vmatpush1.msra.mxu0 0.0
    %117 = vmatprep.subr.mxu0 0.0
    %118 = vmatpush1.msra.mxu0 0.0
    %119 = vmatprep.subr.mxu0 0.0
    %120 = vmatpush1.msra.mxu0 0.0
    %121 = vmatprep.subr.mxu0 0.0
    %122 = vmatpush1.msra.mxu0 0.0
    %123 = vmatprep.subr.mxu0 0.0
    %124 = vmatpush1.msra.mxu0 0.0
    %125 = vmatprep.subr.mxu0 0.0
    %126 = vmatpush1.msra.mxu0 0.0
    %127 = vmatprep.subr.mxu0 0.0
    %128 = vmatpush1.msra.mxu0 0.0
    %129 = vmatprep.subr.mxu0 0.0
    %130 = vmatpush1.msra.mxu0 0.0
    %131 = vmatprep.subr.mxu0 0.0
    %132 = vmatpush1.msra.mxu0 0.0
    %133 = vmatprep.subr.mxu0 0.0
    %134 = vmatpush1.msra.mxu0 0.0
    %135 = vmatprep.mubr.f32.mxu0 0.0
    %136 = vmatmul.mubr.f32.gmra.mrb[0].mxu0 %v66
    %v137 = vpop.f32.mrb[0].mxu0
    %v138 = vadd.f32 %v62, %v137
    %v139 = vpop.f32.mrb[0].mxu0
    %140 = vmatprep.mubr.f32.mxu0 0.0
    %141 = vmatmul.mubr.f32.gmra.mrb[0].mxu0 %v69
    %v142 = vpop.f32.mrb[0].mxu0
    %v143 = vadd.f32 %v62, %v142
    %v144 = vpop.f32.mrb[0].mxu0
    %145 = vdwg.mxu0
    %v146 = vmax.f32 %v138, 0.0
    %v147 = vmax.f32 %v143, 0.0
    %v148 = vld [vmem:[%s3] sm:$0xff]
    %v149 = vld [vmem:[%s3 + $0x8] sm:$0xff]
    %v150 = vld [vmem:[%s3 + $0x10] sm:$0xff]
    %v151 = vld [vmem:[%s3 + $0x18] sm:$0xff]
    %v152 = vld [vmem:[%s3 + $0x20] sm:$0xff]
    %v153 = vld [vmem:[%s3 + $0x28] sm:$0xff]
    %v154 = vld [vmem:[%s3 + $0x30] sm:$0xff]
    %v155 = vld [vmem:[%s3 + $0x38] sm:$0xff]
    %v156 = vld [vmem:[%s3 + $0x40] sm:$0xff]
    %v157 = vld [vmem:[%s3 + $0x48] sm:$0xff]
    %v158 = vld [vmem:[%s3 + $0x50] sm:$0xff]
    %v159 = vld [vmem:[%s3 + $0x58] sm:$0xff]
    %v160 = vld [vmem:[%s3 + $0x60] sm:$0xff]
    %v161 = vld [vmem:[%s3 + $0x68] sm:$0xff]
    %v162 = vld [vmem:[%s3 + $0x70] sm:$0xff]
    %v163 = vld [vmem:[%s3 + $0x78] sm:$0xff]
    %v164 = vld [vmem:[%s4] sm:$0x1]
    %v166 = vlaneseq
    %v167 = vshrl.u32 %v166, 7
    %v168 = vsub.s32 0, %v167
    %v169 = vrot.slane %v164, %v168
    %171 = vmatprep.subr.mxu0 0.0
    %172 = vmatpush1.msra.mxu0 %v148
    %173 = vmatprep.subr.mxu0 0.0
    %174 = vmatpush1.msra.mxu0 %v149
    %175 = vmatprep.subr.mxu0 0.0
    %176 = vmatpush1.msra.mxu0 %v150
    %177 = vmatprep.subr.mxu0 0.0
    %178 = vmatpush1.msra.mxu0 %v151
    %179 = vmatprep.subr.mxu0 0.0
    %180 = vmatpush1.msra.mxu0 %v152
    %181 = vmatprep.subr.mxu0 0.0
    %182 = vmatpush1.msra.mxu0 %v153
    %183 = vmatprep.subr.mxu0 0.0
    %184 = vmatpush1.msra.mxu0 %v154
    %185 = vmatprep.subr.mxu0 0.0
    %186 = vmatpush1.msra.mxu0 %v155
    %187 = vmatprep.subr.mxu0 0.0
    %188 = vmatpush1.msra.mxu0 %v156
    %189 = vmatprep.subr.mxu0 0.0
    %190 = vmatpush1.msra.mxu0 %v157
    %191 = vmatprep.subr.mxu0 0.0
    %192 = vmatpush1.msra.mxu0 %v158
    %193 = vmatprep.subr.mxu0 0.0
    %194 = vmatpush1.msra.mxu0 %v159
    %195 = vmatprep.subr.mxu0 0.0
    %196 = vmatpush1.msra.mxu0 %v160
    %197 = vmatprep.subr.mxu0 0.0
    %198 = vmatpush1.msra.mxu0 %v161
    %199 = vmatprep.subr.mxu0 0.0
    %200 = vmatpush1.msra.mxu0 %v162
    %201 = vmatprep.subr.mxu0 0.0
    %202 = vmatpush1.msra.mxu0 %v163
    %203 = vmatprep.subr.mxu0 0.0
    %204 = vmatpush1.msra.mxu0 0.0
    %205 = vmatprep.subr.mxu0 0.0
    %206 = vmatpush1.msra.mxu0 0.0
    %207 = vmatprep.subr.mxu0 0.0
    %208 = vmatpush1.msra.mxu0 0.0
    %209 = vmatprep.subr.mxu0 0.0
    %210 = vmatpush1.msra.mxu0 0.0
    %211 = vmatprep.subr.mxu0 0.0
    %212 = vmatpush1.msra.mxu0 0.0
    %213 = vmatprep.subr.mxu0 0.0
    %214 = vmatpush1.msra.mxu0 0.0
    %215 = vmatprep.subr.mxu0 0.0
    %216 = vmatpush1.msra.mxu0 0.0
    %217 = vmatprep.subr.mxu0 0.0
    %218 = vmatpush1.msra.mxu0 0.0
    %219 = vmatprep.subr.mxu0 0.0
    %220 = vmatpush1.msra.mxu0 0.0
    %221 = vmatprep.subr.mxu0 0.0
    %222 = vmatpush1.msra.mxu0 0.0
    %223 = vmatprep.subr.mxu0 0.0
    %224 = vmatpush1.msra.mxu0 0.0
    %225 = vmatprep.subr.mxu0 0.0
    %226 = vmatpush1.msra.mxu0 0.0
    %227 = vmatprep.subr.mxu0 0.0
    %228 = vmatpush1.msra.mxu0 0.0
    %229 = vmatprep.subr.mxu0 0.0
    %230 = vmatpush1.msra.mxu0 0.0
    %231 = vmatprep.subr.mxu0 0.0
    %232 = vmatpush1.msra.mxu0 0.0
    %233 = vmatprep.subr.mxu0 0.0
    %234 = vmatpush1.msra.mxu0 0.0
    %235 = vmatprep.mubr.f32.mxu0 0.0
    %236 = vmatmul.mubr.f32.gmra.mrb[0].mxu0 %v146
    %v237 = vpop.f32.mrb[0].mxu0
    %v238 = vadd.f32 %v169, %v237
    %v239 = vpop.f32.mrb[0].mxu0
    %240 = vmatprep.mubr.f32.mxu0 0.0
    %241 = vmatmul.mubr.f32.gmra.mrb[0].mxu0 %v147
    %v242 = vpop.f32.mrb[0].mxu0
    %v243 = vadd.f32 %v169, %v242
    %v244 = vpop.f32.mrb[0].mxu0
    %245 = vdwg.mxu0
    %v246 = vmax.f32 %v238, 0.0
    %v247 = vmax.f32 %v243, 0.0
    %v248 = vld [vmem:[%s5] sm:$0xff]
    %v249 = vld [vmem:[%s5 + $0x8] sm:$0xff]
    %v250 = vld [vmem:[%s5 + $0x10] sm:$0xff]
    %v251 = vld [vmem:[%s5 + $0x18] sm:$0xff]
    %v252 = vld [vmem:[%s5 + $0x20] sm:$0xff]
    %v253 = vld [vmem:[%s5 + $0x28] sm:$0xff]
    %v254 = vld [vmem:[%s5 + $0x30] sm:$0xff]
    %v255 = vld [vmem:[%s5 + $0x38] sm:$0xff]
    %v256 = vld [vmem:[%s6] sm:$0x1]
    %v258 = vlaneseq
    %v259 = vshrl.u32 %v258, 7
    %v260 = vsub.s32 0, %v259
    %v261 = vrot.slane %v256, %v260
    %v264 = vsel %vm64, %v246, 0
    %v267 = vsel %vm64, %v247, 0
    %269 = vmatprep.subr.mxu0 0.0
    %270 = vmatpush1.msra.mxu0 %v248
    %271 = vmatprep.subr.mxu0 0.0
    %272 = vmatpush1.msra.mxu0 %v249
    %273 = vmatprep.subr.mxu0 0.0
    %274 = vmatpush1.msra.mxu0 %v250
    %275 = vmatprep.subr.mxu0 0.0
    %276 = vmatpush1.msra.mxu0 %v251
    %277 = vmatprep.subr.mxu0 0.0
    %278 = vmatpush1.msra.mxu0 %v252
    %279 = vmatprep.subr.mxu0 0.0
    %280 = vmatpush1.msra.mxu0 %v253
    %281 = vmatprep.subr.mxu0 0.0
    %282 = vmatpush1.msra.mxu0 %v254
    %283 = vmatprep.subr.mxu0 0.0
    %284 = vmatpush1.msra.mxu0 %v255
    %285 = vmatprep.subr.mxu0 0.0
    %286 = vmatpush1.msra.mxu0 0.0
    %287 = vmatprep.subr.mxu0 0.0
    %288 = vmatpush1.msra.mxu0 0.0
    %289 = vmatprep.subr.mxu0 0.0
    %290 = vmatpush1.msra.mxu0 0.0
    %291 = vmatprep.subr.mxu0 0.0
    %292 = vmatpush1.msra.mxu0 0.0
    %293 = vmatprep.subr.mxu0 0.0
    %294 = vmatpush1.msra.mxu0 0.0
    %295 = vmatprep.subr.mxu0 0.0
    %296 = vmatpush1.msra.mxu0 0.0
    %297 = vmatprep.subr.mxu0 0.0
    %298 = vmatpush1.msra.mxu0 0.0
    %299 = vmatprep.subr.mxu0 0.0
    %300 = vmatpush1.msra.mxu0 0.0
    %301 = vmatprep.subr.mxu0 0.0
    %302 = vmatpush1.msra.mxu0 0.0
    %303 = vmatprep.subr.mxu0 0.0
    %304 = vmatpush1.msra.mxu0 0.0
    %305 = vmatprep.subr.mxu0 0.0
    %306 = vmatpush1.msra.mxu0 0.0
    %307 = vmatprep.subr.mxu0 0.0
    %308 = vmatpush1.msra.mxu0 0.0
    %309 = vmatprep.subr.mxu0 0.0
    %310 = vmatpush1.msra.mxu0 0.0
    %311 = vmatprep.subr.mxu0 0.0
    %312 = vmatpush1.msra.mxu0 0.0
    %313 = vmatprep.subr.mxu0 0.0
    %314 = vmatpush1.msra.mxu0 0.0
    %315 = vmatprep.subr.mxu0 0.0
    %316 = vmatpush1.msra.mxu0 0.0
    %317 = vmatprep.subr.mxu0 0.0
    %318 = vmatpush1.msra.mxu0 0.0
    %319 = vmatprep.subr.mxu0 0.0
    %320 = vmatpush1.msra.mxu0 0.0
    %321 = vmatprep.subr.mxu0 0.0
    %322 = vmatpush1.msra.mxu0 0.0
    %323 = vmatprep.subr.mxu0 0.0
    %324 = vmatpush1.msra.mxu0 0.0
    %325 = vmatprep.subr.mxu0 0.0
    %326 = vmatpush1.msra.mxu0 0.0
    %327 = vmatprep.subr.mxu0 0.0
    %328 = vmatpush1.msra.mxu0 0.0
    %329 = vmatprep.subr.mxu0 0.0
    %330 = vmatpush1.msra.mxu0 0.0
    %331 = vmatprep.subr.mxu0 0.0
    %332 = vmatpush1.msra.mxu0 0.0
    %333 = vmatprep.mubr.f32.mxu0 0.0
    %334 = vmatmul.mubr.f32.gmra.mrb[0].mxu0 %v264
    %v335 = vpop.f32.mrb[0].mxu0
    %v336 = vadd.f32 %v261, %v335
    %v337 = vpop.f32.mrb[0].mxu0
    %338 = vmatprep.mubr.f32.mxu0 0.0
    %339 = vmatmul.mubr.f32.gmra.mrb[0].mxu0 %v267
    %v340 = vpop.f32.mrb[0].mxu0
    %v341 = vadd.f32 %v261, %v340
    %v342 = vpop.f32.mrb[0].mxu0
    %343 = vdwg.mxu0
    %v344 = vmax.f32 %v336, 0.0
    %v345 = vmax.f32 %v341, 0.0
    %v346 = vld [vmem:[%s7] sm:$0xff]
    %v347 = vld [vmem:[%s7 + $0x8] sm:$0xff]
    %v348 = vld [vmem:[%s7 + $0x10] sm:$0xff]
    %v349 = vld [vmem:[%s7 + $0x18] sm:$0xff]
    %v350 = vld [vmem:[%s7 + $0x20] sm:$0xff]
    %v351 = vld [vmem:[%s7 + $0x28] sm:$0xff]
    %v352 = vld [vmem:[%s7 + $0x30] sm:$0xff]
    %v353 = vld [vmem:[%s7 + $0x38] sm:$0xff]
    %v354 = vld [vmem:[%s8] sm:$0x1]
    %v356 = vlaneseq
    %v357 = vshrl.u32 %v356, 7
    %v358 = vsub.s32 0, %v357
    %v359 = vrot.slane %v354, %v358
    %v362 = vsel %vm64, %v344, 0
    %v365 = vsel %vm64, %v345, 0
    %367 = vmatprep.subr.mxu0 0.0
    %368 = vmatpush1.msra.mxu0 %v346
    %369 = vmatprep.subr.mxu0 0.0
    %370 = vmatpush1.msra.mxu0 %v347
    %371 = vmatprep.subr.mxu0 0.0
    %372 = vmatpush1.msra.mxu0 %v348
    %373 = vmatprep.subr.mxu0 0.0
    %374 = vmatpush1.msra.mxu0 %v349
    %375 = vmatprep.subr.mxu0 0.0
    %376 = vmatpush1.msra.mxu0 %v350
    %377 = vmatprep.subr.mxu0 0.0
    %378 = vmatpush1.msra.mxu0 %v351
    %379 = vmatprep.subr.mxu0 0.0
    %380 = vmatpush1.msra.mxu0 %v352
    %381 = vmatprep.subr.mxu0 0.0
    %382 = vmatpush1.msra.mxu0 %v353
    %383 = vmatprep.subr.mxu0 0.0
    %384 = vmatpush1.msra.mxu0 0.0
    %385 = vmatprep.subr.mxu0 0.0
    %386 = vmatpush1.msra.mxu0 0.0
    %387 = vmatprep.subr.mxu0 0.0
    %388 = vmatpush1.msra.mxu0 0.0
    %389 = vmatprep.subr.mxu0 0.0
    %390 = vmatpush1.msra.mxu0 0.0
    %391 = vmatprep.subr.mxu0 0.0
    %392 = vmatpush1.msra.mxu0 0.0
    %393 = vmatprep.subr.mxu0 0.0
    %394 = vmatpush1.msra.mxu0 0.0
    %395 = vmatprep.subr.mxu0 0.0
    %396 = vmatpush1.msra.mxu0 0.0
    %397 = vmatprep.subr.mxu0 0.0
    %398 = vmatpush1.msra.mxu0 0.0
    %399 = vmatprep.subr.mxu0 0.0
    %400 = vmatpush1.msra.mxu0 0.0
    %401 = vmatprep.subr.mxu0 0.0
    %402 = vmatpush1.msra.mxu0 0.0
    %403 = vmatprep.subr.mxu0 0.0
    %404 = vmatpush1.msra.mxu0 0.0
    %405 = vmatprep.subr.mxu0 0.0
    %406 = vmatpush1.msra.mxu0 0.0
    %407 = vmatprep.subr.mxu0 0.0
    %408 = vmatpush1.msra.mxu0 0.0
    %409 = vmatprep.subr.mxu0 0.0
    %410 = vmatpush1.msra.mxu0 0.0
    %411 = vmatprep.subr.mxu0 0.0
    %412 = vmatpush1.msra.mxu0 0.0
    %413 = vmatprep.subr.mxu0 0.0
    %414 = vmatpush1.msra.mxu0 0.0
    %415 = vmatprep.subr.mxu0 0.0
    %416 = vmatpush1.msra.mxu0 0.0
    %417 = vmatprep.subr.mxu0 0.0
    %418 = vmatpush1.msra.mxu0 0.0
    %419 = vmatprep.subr.mxu0 0.0
    %420 = vmatpush1.msra.mxu0 0.0
    %421 = vmatprep.subr.mxu0 0.0
    %422 = vmatpush1.msra.mxu0 0.0
    %423 = vmatprep.subr.mxu0 0.0
    %424 = vmatpush1.msra.mxu0 0.0
    %425 = vmatprep.subr.mxu0 0.0
    %426 = vmatpush1.msra.mxu0 0.0
    %427 = vmatprep.subr.mxu0 0.0
    %428 = vmatpush1.msra.mxu0 0.0
    %429 = vmatprep.subr.mxu0 0.0
    %430 = vmatpush1.msra.mxu0 0.0
    %431 = vmatprep.mubr.f32.mxu0 0.0
    %432 = vmatmul.mubr.f32.gmra.mrb[0].mxu0 %v362
    %v433 = vpop.f32.mrb[0].mxu0
    %v434 = vadd.f32 %v359, %v433
    %v435 = vpop.f32.mrb[0].mxu0
    %436 = vmatprep.mubr.f32.mxu0 0.0
    %437 = vmatmul.mubr.f32.gmra.mrb[0].mxu0 %v365
    %v438 = vpop.f32.mrb[0].mxu0
    %v439 = vadd.f32 %v359, %v438
    %v440 = vpop.f32.mrb[0].mxu0
    %441 = vdwg.mxu0
    %v442 = vmax.f32 %v434, 0.0
    %v443 = vmax.f32 %v439, 0.0
    %v445 = vsel %vm64, %v442, 0
    %v448 = vsel %vm64, %v443, 0
    %450 = vmatprep.subr.mxu0 0.0
    %451 = vmatpush1.msra.mxu0 %v346
    %452 = vmatprep.subr.mxu0 0.0
    %453 = vmatpush1.msra.mxu0 %v347
    %454 = vmatprep.subr.mxu0 0.0
    %455 = vmatpush1.msra.mxu0 %v348
    %456 = vmatprep.subr.mxu0 0.0
    %457 = vmatpush1.msra.mxu0 %v349
    %458 = vmatprep.subr.mxu0 0.0
    %459 = vmatpush1.msra.mxu0 %v350
    %460 = vmatprep.subr.mxu0 0.0
    %461 = vmatpush1.msra.mxu0 %v351
    %462 = vmatprep.subr.mxu0 0.0
    %463 = vmatpush1.msra.mxu0 %v352
    %464 = vmatprep.subr.mxu0 0.0
    %465 = vmatpush1.msra.mxu0 %v353
    %466 = vmatprep.subr.mxu0 0.0
    %467 = vmatpush1.msra.mxu0 0.0
    %468 = vmatprep.subr.mxu0 0.0
    %469 = vmatpush1.msra.mxu0 0.0
    %470 = vmatprep.subr.mxu0 0.0
    %471 = vmatpush1.msra.mxu0 0.0
    %472 = vmatprep.subr.mxu0 0.0
    %473 = vmatpush1.msra.mxu0 0.0
    %474 = vmatprep.subr.mxu0 0.0
    %475 = vmatpush1.msra.mxu0 0.0
    %476 = vmatprep.subr.mxu0 0.0
    %477 = vmatpush1.msra.mxu0 0.0
    %478 = vmatprep.subr.mxu0 0.0
    %479 = vmatpush1.msra.mxu0 0.0
    %480 = vmatprep.subr.mxu0 0.0
    %481 = vmatpush1.msra.mxu0 0.0
    %482 = vmatprep.subr.mxu0 0.0
    %483 = vmatpush1.msra.mxu0 0.0
    %484 = vmatprep.subr.mxu0 0.0
    %485 = vmatpush1.msra.mxu0 0.0
    %486 = vmatprep.subr.mxu0 0.0
    %487 = vmatpush1.msra.mxu0 0.0
    %488 = vmatprep.subr.mxu0 0.0
    %489 = vmatpush1.msra.mxu0 0.0
    %490 = vmatprep.subr.mxu0 0.0
    %491 = vmatpush1.msra.mxu0 0.0
    %492 = vmatprep.subr.mxu0 0.0
    %493 = vmatpush1.msra.mxu0 0.0
    %494 = vmatprep.subr.mxu0 0.0
    %495 = vmatpush1.msra.mxu0 0.0
    %496 = vmatprep.subr.mxu0 0.0
    %497 = vmatpush1.msra.mxu0 0.0
    %498 = vmatprep.subr.mxu0 0.0
    %499 = vmatpush1.msra.mxu0 0.0
    %500 = vmatprep.subr.mxu0 0.0
    %501 = vmatpush1.msra.mxu0 0.0
    %502 = vmatprep.subr.mxu0 0.0
    %503 = vmatpush1.msra.mxu0 0.0
    %504 = vmatprep.subr.mxu0 0.0
    %505 = vmatpush1.msra.mxu0 0.0
    %506 = vmatprep.subr.mxu0 0.0
    %507 = vmatpush1.msra.mxu0 0.0
    %508 = vmatprep.subr.mxu0 0.0
    %509 = vmatpush1.msra.mxu0 0.0
    %510 = vmatprep.subr.mxu0 0.0
    %511 = vmatpush1.msra.mxu0 0.0
    %512 = vmatprep.subr.mxu0 0.0
    %513 = vmatpush1.msra.mxu0 0.0
    %514 = vmatprep.mubr.f32.mxu0 0.0
    %515 = vmatmul.mubr.f32.gmra.mrb[0].mxu0 %v445
    %v516 = vpop.f32.mrb[0].mxu0
    %v517 = vadd.f32 %v359, %v516
    %v518 = vpop.f32.mrb[0].mxu0
    %519 = vmatprep.mubr.f32.mxu0 0.0
    %520 = vmatmul.mubr.f32.gmra.mrb[0].mxu0 %v448
    %v521 = vpop.f32.mrb[0].mxu0
    %v522 = vadd.f32 %v359, %v521
    %v523 = vpop.f32.mrb[0].mxu0
    %524 = vdwg.mxu0
    %v525 = vsel %vm64, %v517, -inf
    %526 = vmax.xlane.f32.xlu0 %v525
    %v527 = vpop.xlane.xlu0 %526
    %v528 = vsel %vm64, %v522, -inf
    %529 = vmax.xlane.f32.xlu0 %v528
    %v530 = vpop.xlane.xlu0 %529
    %v531 = vsub.f32 %v517, %v527
    %v532 = vsub.f32 %v522, %v530
    %v533 = vmul.f32 %v531, 1.442695
    %v534 = vpow.pop %v533
    %v535 = vmul.f32 %v532, 1.442695
    %v536 = vpow.pop %v535
    %v537 = vsel %vm64, %v534, 0.0
    %538 = vadd.xlane.f32.xlu0 %v537
    %v539 = vpop.xlane.xlu0 %538
    %v540 = vsel %vm64, %v536, 0.0
    %541 = vadd.xlane.f32.xlu0 %v540
    %v542 = vpop.xlane.xlu0 %541
    %v543 = vrcp.pop %v539
    %v544 = vmul.f32 1.0, %v543
    %v545 = vrcp.pop %v542
    %v546 = vmul.f32 1.0, %v545
    %v547 = vmul.f32 %v534, %v544
    %v548 = vmul.f32 %v536, %v546
    %549 = vst.msk [vmem:[#allocation5] sm:$0xff] %vm64, %v547
    %550 = vst.msk [vmem:[#allocation5 + $0x8] sm:$0xff] %vm64, %v548
    // Predicated region
    $region42: #{tpu_custom_call.1} parent=1 // pred_check
      _
    $region43: #{tpu_custom_call.1} parent=1 // pred_check_branch
      %552 = sbr.rel (0) target = $region45
    $region44: #{tpu_custom_call.1} parent=1 // pred_region
      %s554 = ssub.s32 256, 256
      %555 = vsyncadd [#allocation4], %s554
      %s556 = sshll.u32 [#allocation5], 4
      %s557 = int_to_ptr.vmem [resolvable:$true] %s556
      %562 = dma.vmem_to_hbm [thread:$0]  %s557, 256, %s9, [#allocation4], 128, 128, 8
    $region45: #{tpu_custom_call.1} parent=1 // pred_fallthru
      _
    // Predicated region
    $region46: #{tpu_custom_call.1} parent=1 // pred_check
      _
    $region47: #{tpu_custom_call.1} parent=1 // pred_check_branch
      %564 = sbr.rel (0) target = $region49
    $region48: #{tpu_custom_call.1} parent=1 // pred_region
      %565 = dma.done [#allocation4], 256
    $region49: #{tpu_custom_call.1} parent=1 // pred_fallthru
      _
    %566 = vsyncpa [#allocation3], 1
    %567 = vsyncpa [#allocation4], 1

</llo_original>
